<compile_context>
chip_gen: v7x
topology: tpu7x:2x2x1
jax: 0.10.0
libtpu: 0.0.40
codegen_flags: <defaults>
</compile_context>

<pallas_src>
import jax
import jax.numpy as jnp
from jax.experimental import pallas as pl
from jax.experimental.pallas import tpu as pltpu


# ----------------------------- hardware helpers -----------------------------

def _round_up(x, m):
    return ((x + m - 1) // m) * m


def _sublane_multiple(itemsize):
    # f32 -> 8 sublanes/vreg, bf16 -> 16, int8/fp8 -> 32
    return max(8, 32 // max(int(itemsize), 1))


def _vmem_capacity_bytes():
    try:
        return int(pltpu.get_tpu_info().vmem_capacity_bytes)
    except Exception:
        return 64 * 1024 * 1024  # conservative default (v7x per-TensorCore VMEM)


def _num_tensorcores():
    try:
        kind = jax.devices()[0].device_kind.lower()
        if ("v7" in kind) or ("v4" in kind) or ("v5p" in kind):
            return 2
    except Exception:
        pass
    return 1


def _block_budget_bytes():
    # Budget for ONE buffer set (double buffering accounted by caller).
    # ~40% of VMEM per buffer set keeps blocks*2 well under physical capacity
    # (<= ~51 MiB on v7x's 64 MiB, ~102 MiB on v5e/v6e's 128 MiB).
    return int(_vmem_capacity_bytes() * 0.4)


def _vmem_limit_bytes():
    return int(min(_vmem_capacity_bytes() * 0.85, 100 * 1024 * 1024))


# --------------------------- path 1: lane-dense VPU --------------------------

def _baens_lane_kernel(x_ref, u_ref, b_ref, o_ref):
    # x_ref: (B, D1, TN)  u_ref: (D1, D2, TN)  b_ref/o_ref: (B, D2, TN)
    # The ensemble axis lives on the lane dim -> pure per-lane VPU FMAs and
    # fully dense (unmasked) stores.
    x = x_ref[...].astype(jnp.float32)
    u = u_ref[...].astype(jnp.float32)
    acc = b_ref[...].astype(jnp.float32)
    d1 = x.shape[1]
    for d in range(d1):  # static unroll; D1 is small on this path
        acc = acc + x[:, d:d + 1, :] * u[d][None, :, :]
    o_ref[...] = acc.astype(o_ref.dtype)


def _lane_block_bytes(tn, B, D1, D2, itemsize):
    sub = _sublane_multiple(itemsize)
    lanes = _round_up(tn, 128)
    rows = (B * _round_up(D1, sub)        # x_t  (B, D1, TN)
            + D1 * _round_up(D2, sub)     # U_t  (D1, D2, TN)
            + 2 * B * _round_up(D2, sub)) # bias_t + out_t (B, D2, TN)
    return rows * lanes * itemsize


def _pick_lane_tile(N, B, D1, D2, itemsize):
    """Largest lane tile (== N, or a multiple of 128 dividing N) that fits VMEM."""
    budget = _block_budget_bytes()

    def fits(tn):
        return _lane_block_bytes(tn, B, D1, D2, itemsize) <= budget

    if fits(N):
        return N
    if N % 128 == 0:
        tn = (N // 128 // 2) * 128
        while tn >= 128:
            if N % tn == 0 and fits(tn):
                return tn
            tn -= 128
    return 0  # no valid lane tile -> caller falls back to the einsum path


def _dense_baens_lane(x, U, bias, tn):
    N, B, D1 = x.shape
    D2 = U.shape[2]
    x_t = jnp.transpose(x, (1, 2, 0))     # (B, D1, N)
    u_t = jnp.transpose(U, (1, 2, 0))     # (D1, D2, N)
    b_t = jnp.transpose(bias, (1, 2, 0))  # (B, D2, N)

    out_t = pl.pallas_call(
        _baens_lane_kernel,
        out_shape=jax.ShapeDtypeStruct((B, D2, N), x.dtype),
        grid=(N // tn,),
        in_specs=[
            pl.BlockSpec((B, D1, tn), lambda n: (0, 0, n)),
            pl.BlockSpec((D1, D2, tn), lambda n: (0, 0, n)),
            pl.BlockSpec((B, D2, tn), lambda n: (0, 0, n)),
        ],
        out_specs=pl.BlockSpec((B, D2, tn), lambda n: (0, 0, n)),
        compiler_params=pltpu.CompilerParams(
            dimension_semantics=("parallel",),
            vmem_limit_bytes=_vmem_limit_bytes(),
        ),
    )(x_t, u_t, b_t)
    return jnp.transpose(out_t, (2, 0, 1))  # (N, B, D2)


# --------------------------- path 2: fused-Ng MXU ----------------------------

def _baens_einsum_kernel(x_ref, u_ref, b_ref, o_ref):
    # x_ref: (Ng, B, D1)  u_ref: (Ng, D1, D2)  b_ref/o_ref: (Ng, B, D2)
    acc = jnp.einsum(
        "nbd,nde->nbe",
        x_ref[...],
        u_ref[...],
        preferred_element_type=jnp.float32,
    )
    o_ref[...] = (acc + b_ref[...].astype(jnp.float32)).astype(o_ref.dtype)


def _member_block_bytes(B, D1, D2, itemsize):
    # One ensemble member's blocks, accounting for (sublane, 128) tile padding.
    sub = _sublane_multiple(itemsize)
    x_b = _round_up(B, sub) * _round_up(D1, 128)
    u_b = _round_up(D1, sub) * _round_up(D2, 128)
    bo_b = 2 * _round_up(B, sub) * _round_up(D2, 128)  # bias + out
    return (x_b + u_b + bo_b) * itemsize


def _pick_ng(N, B, D1, D2, itemsize):
    """Members fused per grid step: fits padded+double-buffered VMEM, divides N."""
    per_member = _member_block_bytes(B, D1, D2, itemsize)
    budget = _block_budget_bytes()  # per single buffer set (x2 buffers implied)
    max_by_vmem = max(1, budget // max(per_member, 1))

    cap = N
    if _num_tensorcores() > 1 and N >= 4:
        # keep >= ~2 steps per core so pipelining can hide prefetch/writeback
        cap = max(1, -(-N // 4))

    limit = max(1, min(N, max_by_vmem, cap))
    for ng in range(limit, 0, -1):  # largest divisor of N <= limit (no jnp.pad)
        if N % ng == 0:
            return ng
    return 1


def _dense_baens_einsum(x, U, bias, ng):
    N, B, D1 = x.shape
    D2 = U.shape[2]
    return pl.pallas_call(
        _baens_einsum_kernel,
        out_shape=jax.ShapeDtypeStruct((N, B, D2), x.dtype),
        grid=(N // ng,),
        in_specs=[
            pl.BlockSpec((ng, B, D1), lambda n: (n, 0, 0)),
            pl.BlockSpec((ng, D1, D2), lambda n: (n, 0, 0)),
            pl.BlockSpec((ng, B, D2), lambda n: (n, 0, 0)),
        ],
        out_specs=pl.BlockSpec((ng, B, D2), lambda n: (n, 0, 0)),
        compiler_params=pltpu.CompilerParams(
            dimension_semantics=("parallel",),
            vmem_limit_bytes=_vmem_limit_bytes(),
        ),
    )(x, U, bias)


# --------------------------------- dispatcher --------------------------------

def dense_baens_forward(x, U, bias):
    """Pallas TPU implementation of dense_baens.forward (bmm + bias)."""
    N, B, D1 = x.shape
    D2 = U.shape[2]
    itemsize = jnp.dtype(x.dtype).itemsize

    # Small-feature regime: lane-dense layout + VPU FMAs.
    if max(B, D1, D2) <= 16:
        tn = _pick_lane_tile(N, B, D1, D2, itemsize)
        if tn:
            return _dense_baens_lane(x, U, bias, tn)

    # General regime: fuse ng members per step, batched MXU einsum.
    ng = _pick_ng(N, B, D1, D2, itemsize)
    return _dense_baens_einsum(x, U, bias, ng)


if __name__ == "__main__":
    key = jax.random.PRNGKey(0)
    k_x, k_u, k_b, k_x2, k_u2, k_b2 = jax.random.split(key, 6)

    # ---- Test 1: module defaults (N=5, B=4, D1=3, D2=2) -> lane-dense path ----
    N, B, D1, D2 = 5, 4, 3, 2
    U = 0.01 * jax.random.normal(k_u, (N, D1, D2), dtype=jnp.float32)
    bias = 0.01 * jax.random.normal(k_b, (N, B, D2), dtype=jnp.float32)
    x = jax.random.normal(k_x, (N, B, D1), dtype=jnp.float32)

    out = jax.block_until_ready(dense_baens_forward(x, U, bias))
    ref = jnp.einsum("nbd,nde->nbe", x, U) + bias
    assert out.shape == (N, B, D2)
    assert jnp.allclose(out, ref, atol=1e-5, rtol=1e-5), "lane-dense path mismatch"

    # ---- Test 2: larger feature dims -> fused-Ng MXU einsum path ----
    N2, B2, Dx, Dy = 6, 8, 128, 256
    U2 = 0.01 * jax.random.normal(k_u2, (N2, Dx, Dy), dtype=jnp.float32)
    bias2 = 0.01 * jax.random.normal(k_b2, (N2, B2, Dy), dtype=jnp.float32)
    x2 = jax.random.normal(k_x2, (N2, B2, Dx), dtype=jnp.float32)

    out2 = jax.block_until_ready(dense_baens_forward(x2, U2, bias2))
    ref2 = jnp.einsum("nbd,nde->nbe", x2, U2) + bias2
    assert out2.shape == (N2, B2, Dy)
    assert jnp.allclose(out2, ref2, atol=3e-3, rtol=1e-2), "einsum path mismatch"

    print("KERNEL_OK")
</pallas_src>

<mosaic_0001>
module attributes {stable_mosaic.version = 11 : i64} {
  func.func @_baens_lane_kernel(%arg0: i32, %arg1: memref<4x3x5xf32, #tpu.memory_space<vmem>>, %arg2: memref<3x2x5xf32, #tpu.memory_space<vmem>>, %arg3: memref<4x2x5xf32, #tpu.memory_space<vmem>>, %arg4: memref<4x2x5xf32, #tpu.memory_space<vmem>>) attributes {dimension_semantics = [#tpu.dimension_semantics<parallel>], iteration_bounds = array<i64: 1>, scalar_prefetch = 0 : i64, scratch_operands = 0 : i64, tpu.core_type = #tpu.core_type<tc>, window_params = [{transform_indices = @transform_0, window_bounds = array<i64: 4, 3, 5>}, {transform_indices = @transform_1, window_bounds = array<i64: 3, 2, 5>}, {transform_indices = @transform_2, window_bounds = array<i64: 4, 2, 5>}, {transform_indices = @transform_3, window_bounds = array<i64: 4, 2, 5>}]} {
    %c0 = arith.constant 0 : index
    %c0_0 = arith.constant 0 : index
    %c0_1 = arith.constant 0 : index
    %0 = vector.load %arg1[%c0, %c0_0, %c0_1] : memref<4x3x5xf32, #tpu.memory_space<vmem>>, vector<4x3x5xf32>
    %c0_2 = arith.constant 0 : index
    %c0_3 = arith.constant 0 : index
    %c0_4 = arith.constant 0 : index
    %1 = vector.load %arg2[%c0_2, %c0_3, %c0_4] : memref<3x2x5xf32, #tpu.memory_space<vmem>>, vector<3x2x5xf32>
    %c0_5 = arith.constant 0 : index
    %c0_6 = arith.constant 0 : index
    %c0_7 = arith.constant 0 : index
    %2 = vector.load %arg3[%c0_5, %c0_6, %c0_7] : memref<4x2x5xf32, #tpu.memory_space<vmem>>, vector<4x2x5xf32>
    %3 = vector.extract_strided_slice %0 {offsets = [0, 0, 0], sizes = [4, 1, 5], strides = [1, 1, 1]} : vector<4x3x5xf32> to vector<4x1x5xf32>
    %4 = vector.extract_strided_slice %1 {offsets = [0, 0, 0], sizes = [1, 2, 5], strides = [1, 1, 1]} : vector<3x2x5xf32> to vector<1x2x5xf32>
    %5 = vector.shape_cast %4 : vector<1x2x5xf32> to vector<2x5xf32>
    %6 = vector.shape_cast %5 : vector<2x5xf32> to vector<1x2x5xf32>
    %7 = vector.broadcast %3 : vector<4x1x5xf32> to vector<4x2x5xf32>
    %8 = vector.broadcast %6 : vector<1x2x5xf32> to vector<4x2x5xf32>
    %9 = arith.mulf %7, %8 : vector<4x2x5xf32>
    %10 = arith.addf %2, %9 : vector<4x2x5xf32>
    %11 = vector.extract_strided_slice %0 {offsets = [0, 1, 0], sizes = [4, 1, 5], strides = [1, 1, 1]} : vector<4x3x5xf32> to vector<4x1x5xf32>
    %12 = vector.extract_strided_slice %1 {offsets = [1, 0, 0], sizes = [1, 2, 5], strides = [1, 1, 1]} : vector<3x2x5xf32> to vector<1x2x5xf32>
    %13 = vector.shape_cast %12 : vector<1x2x5xf32> to vector<2x5xf32>
    %14 = vector.shape_cast %13 : vector<2x5xf32> to vector<1x2x5xf32>
    %15 = vector.broadcast %11 : vector<4x1x5xf32> to vector<4x2x5xf32>
    %16 = vector.broadcast %14 : vector<1x2x5xf32> to vector<4x2x5xf32>
    %17 = arith.mulf %15, %16 : vector<4x2x5xf32>
    %18 = arith.addf %10, %17 : vector<4x2x5xf32>
    %19 = vector.extract_strided_slice %0 {offsets = [0, 2, 0], sizes = [4, 1, 5], strides = [1, 1, 1]} : vector<4x3x5xf32> to vector<4x1x5xf32>
    %20 = vector.extract_strided_slice %1 {offsets = [2, 0, 0], sizes = [1, 2, 5], strides = [1, 1, 1]} : vector<3x2x5xf32> to vector<1x2x5xf32>
    %21 = vector.shape_cast %20 : vector<1x2x5xf32> to vector<2x5xf32>
    %22 = vector.shape_cast %21 : vector<2x5xf32> to vector<1x2x5xf32>
    %23 = vector.broadcast %19 : vector<4x1x5xf32> to vector<4x2x5xf32>
    %24 = vector.broadcast %22 : vector<1x2x5xf32> to vector<4x2x5xf32>
    %25 = arith.mulf %23, %24 : vector<4x2x5xf32>
    %26 = arith.addf %18, %25 : vector<4x2x5xf32>
    %c0_8 = arith.constant 0 : index
    %c0_9 = arith.constant 0 : index
    %c0_10 = arith.constant 0 : index
    %27 = vector.load %arg4[%c0_8, %c0_9, %c0_10] : memref<4x2x5xf32, #tpu.memory_space<vmem>>, vector<4x2x5xf32>
    tpu.vector_store %arg4[%c0_8, %c0_9, %c0_10], %26 {strides = array<i32>} : memref<4x2x5xf32, #tpu.memory_space<vmem>>, vector<4x2x5xf32>,
    return
  }
  func.func @transform_0(%arg0: i32) -> (i32, i32, i32) {
    %c0_i32 = arith.constant 0 : i32
    %c0_i32_0 = arith.constant 0 : i32
    %c0_i32_1 = arith.constant 0 : i32
    return %c0_i32, %c0_i32_0, %arg0 : i32, i32, i32
  }
  func.func @transform_1(%arg0: i32) -> (i32, i32, i32) {
    %c0_i32 = arith.constant 0 : i32
    %c0_i32_0 = arith.constant 0 : i32
    %c0_i32_1 = arith.constant 0 : i32
    return %c0_i32, %c0_i32_0, %arg0 : i32, i32, i32
  }
  func.func @transform_2(%arg0: i32) -> (i32, i32, i32) {
    %c0_i32 = arith.constant 0 : i32
    %c0_i32_0 = arith.constant 0 : i32
    %c0_i32_1 = arith.constant 0 : i32
    return %c0_i32, %c0_i32_0, %arg0 : i32, i32, i32
  }
  func.func @transform_3(%arg0: i32) -> (i32, i32, i32) {
    %c0_i32 = arith.constant 0 : i32
    %c0_i32_0 = arith.constant 0 : i32
    %c0_i32_1 = arith.constant 0 : i32
    return %c0_i32, %c0_i32_0, %arg0 : i32, i32, i32
  }
}

</mosaic_0001>

<llo_original>
// kernel: tpu_custom_call.1
$region0: #{tpu_custom_call.1}
  #allocation0 [shape = 'u32[]', space=smem, size = 0x4, offset = 0x4, fixed_abs, tag = 'smem constant byte address 0x4 - core index']
  #allocation1 [shape = 'u32[144,128]{1,0:T(1,128)}', space=vmem, size = 0x12000, scoped, tag = 'internal scratch']
  %s0 = inlined_call_operand.vmem [shape: f32[4,3,5], index: 0, kind: input, shape index: {}]
  %s1 = inlined_call_operand.vmem [shape: f32[3,2,5], index: 1, kind: input, shape index: {}]
  %s2 = inlined_call_operand.vmem [shape: f32[4,2,5], index: 2, kind: input, shape index: {}]
  %s3 = inlined_call_operand.hbm [shape: f32[4,2,5], index: 3, kind: output, shape index: {}]
  %s4 = sld [smem:[#allocation0]]
  $region22: #{tpu_custom_call.1} parent=0
    _
  %s6 = ssub.s32 1, %s4
  %s7 = scalar_select 0, %s6, %s4
  $region1: #{tpu_custom_call.1} parent=0
    #allocation2 [shape = 'u8[4096]{0}', space=vmem, size = 0x1000, scoped, tag = 'output window, operand 0, single buffered']
    #allocation3 [shape = 's32[1]{0}', space=sflag, size = 0x4, scoped, tag = 'scoped memory for tpu_custom_call.1']
    %8 = vsyncpa [#allocation3], 0
    // Predicated region
    $region2: #{tpu_custom_call.1} parent=1 // pred_check
      _
    $region3: #{tpu_custom_call.1} parent=1 // pred_check_branch
      %10 = sbr.rel (0) target = $region5
    $region4: #{tpu_custom_call.1} parent=1 // pred_region
      _
    $region5: #{tpu_custom_call.1} parent=1 // pred_fallthru
      _
    // Predicated region
    $region6: #{tpu_custom_call.1} parent=1 // pred_check
      _
    $region7: #{tpu_custom_call.1} parent=1 // pred_check_branch
      %12 = sbr.rel (0) target = $region9
    $region8: #{tpu_custom_call.1} parent=1 // pred_region
      _
    $region9: #{tpu_custom_call.1} parent=1 // pred_fallthru
      _
    // Predicated region
    $region10: #{tpu_custom_call.1} parent=1 // pred_check
      _
    $region11: #{tpu_custom_call.1} parent=1 // pred_check_branch
      %14 = sbr.rel (0) target = $region13
    $region12: #{tpu_custom_call.1} parent=1 // pred_region
      _
    $region13: #{tpu_custom_call.1} parent=1 // pred_fallthru
      _
    %v15 = vld [vmem:[%s0] sm:$0x7]
    %v16 = vld [vmem:[%s0 + $0x4] sm:$0x7]
    %v17 = vld [vmem:[%s0 + $0x8] sm:$0x7]
    %v18 = vld [vmem:[%s0 + $0xc] sm:$0x7]
    %v19 = vld [vmem:[%s1] sm:$0x3]
    %v20 = vld [vmem:[%s1 + $0x2] sm:$0x3]
    %v21 = vld [vmem:[%s1 + $0x4] sm:$0x3]
    %v22 = vld [vmem:[%s2] sm:$0x3]
    %v23 = vld [vmem:[%s2 + $0x2] sm:$0x3]
    %v24 = vld [vmem:[%s2 + $0x4] sm:$0x3]
    %v25 = vld [vmem:[%s2 + $0x6] sm:$0x3]
    %v26 = vlaneseq
    %v27 = vshrl.u32 %v26, 7
    %v28 = vsub.s32 0, %v27
    %v29 = vrot.slane %v15, %v28
    %v30 = vlaneseq
    %v31 = vshrl.u32 %v30, 7
    %v32 = vsub.s32 0, %v31
    %v33 = vrot.slane %v16, %v32
    %v34 = vlaneseq
    %v35 = vshrl.u32 %v34, 7
    %v36 = vsub.s32 0, %v35
    %v37 = vrot.slane %v17, %v36
    %v38 = vlaneseq
    %v39 = vshrl.u32 %v38, 7
    %v40 = vsub.s32 0, %v39
    %v41 = vrot.slane %v18, %v40
    %v42 = vmul.f32 %v29, %v19
    %v43 = vmul.f32 %v33, %v19
    %v44 = vmul.f32 %v37, %v19
    %v45 = vmul.f32 %v41, %v19
    %v46 = vadd.f32 %v22, %v42
    %v47 = vadd.f32 %v23, %v43
    %v48 = vadd.f32 %v24, %v44
    %v49 = vadd.f32 %v25, %v45
    %v50 = vlaneseq
    %v51 = vshrl.u32 %v50, 7
    %v52 = vsub.s32 1, %v51
    %v53 = vrot.slane %v15, %v52
    %v54 = vlaneseq
    %v55 = vshrl.u32 %v54, 7
    %v56 = vsub.s32 1, %v55
    %v57 = vrot.slane %v16, %v56
    %v58 = vlaneseq
    %v59 = vshrl.u32 %v58, 7
    %v60 = vsub.s32 1, %v59
    %v61 = vrot.slane %v17, %v60
    %v62 = vlaneseq
    %v63 = vshrl.u32 %v62, 7
    %v64 = vsub.s32 1, %v63
    %v65 = vrot.slane %v18, %v64
    %v66 = vmul.f32 %v53, %v20
    %v67 = vmul.f32 %v57, %v20
    %v68 = vmul.f32 %v61, %v20
    %v69 = vmul.f32 %v65, %v20
    %v70 = vadd.f32 %v46, %v66
    %v71 = vadd.f32 %v47, %v67
    %v72 = vadd.f32 %v48, %v68
    %v73 = vadd.f32 %v49, %v69
    %v74 = vlaneseq
    %v75 = vshrl.u32 %v74, 7
    %v76 = vsub.s32 2, %v75
    %v77 = vrot.slane %v15, %v76
    %v78 = vlaneseq
    %v79 = vshrl.u32 %v78, 7
    %v80 = vsub.s32 2, %v79
    %v81 = vrot.slane %v16, %v80
    %v82 = vlaneseq
    %v83 = vshrl.u32 %v82, 7
    %v84 = vsub.s32 2, %v83
    %v85 = vrot.slane %v17, %v84
    %v86 = vlaneseq
    %v87 = vshrl.u32 %v86, 7
    %v88 = vsub.s32 2, %v87
    %v89 = vrot.slane %v18, %v88
    %v90 = vmul.f32 %v77, %v21
    %v91 = vmul.f32 %v81, %v21
    %v92 = vmul.f32 %v85, %v21
    %v93 = vmul.f32 %v89, %v21
    %v94 = vadd.f32 %v70, %v90
    %v95 = vadd.f32 %v71, %v91
    %v96 = vadd.f32 %v72, %v92
    %v97 = vadd.f32 %v73, %v93
    %vm98 = vcmask 33792
    %99 = vst.msk [vmem:[#allocation2] sm:$0x3] %vm98, %v94
    %100 = vst.msk [vmem:[#allocation2 + $0x2] sm:$0x3] %vm98, %v95
    %101 = vst.msk [vmem:[#allocation2 + $0x4] sm:$0x3] %vm98, %v96
    %102 = vst.msk [vmem:[#allocation2 + $0x6] sm:$0x3] %vm98, %v97
    // Predicated region
    $region14: #{tpu_custom_call.1} parent=1 // pred_check
      _
    $region15: #{tpu_custom_call.1} parent=1 // pred_check_branch
      %104 = sbr.rel (0) target = $region17
    $region16: #{tpu_custom_call.1} parent=1 // pred_region
      %s106 = ssub.s32 128, 128
      %107 = vsyncadd [#allocation3], %s106
      %s108 = sshll.u32 [#allocation2], 4
      %s109 = int_to_ptr.vmem [resolvable:$true] %s108
      %114 = dma.vmem_to_hbm [thread:$0]  %s109, 128, %s3, [#allocation3], 32, 32, 2
    $region17: #{tpu_custom_call.1} parent=1 // pred_fallthru
      _
    // Predicated region
    $region18: #{tpu_custom_call.1} parent=1 // pred_check
      _
    $region19: #{tpu_custom_call.1} parent=1 // pred_check_branch
      %116 = sbr.rel (0) target = $region21
    $region20: #{tpu_custom_call.1} parent=1 // pred_region
      %117 = dma.done [#allocation3], 128
    $region21: #{tpu_custom_call.1} parent=1 // pred_fallthru
      _
    %118 = vsyncpa [#allocation3], 1

</llo_original>
